<compile_context>
chip_gen: v7x
topology: tpu7x:2x2x1
jax: 0.10.0
libtpu: 0.0.40
codegen_flags: <defaults>
</compile_context>

<pallas_src>
import functools

import jax
import jax.numpy as jnp
from jax.experimental import pallas as pl
from jax.experimental.pallas import tpu as pltpu


_LANES = 128
_SUBLANES = 8
_ROW_ALIGN = 128                      # covers f32/bf16/int8 sublane multiples
_FAST_PATH_ELEMENTS = 1 << 16         # below this, plain jnp beats kernel launch
_VMEM_BUDGET = 24 * 1024 * 1024       # target pipeline footprint (v7x-safe)
_VMEM_LIMIT = 48 * 1024 * 1024        # scoped VMEM limit (<= ~48 MiB on v7x)
_MAX_PRED_BUF = 8 * 1024 * 1024       # per padded logits pipeline buffer


def _ce_partial_kernel(pred_ref, label_ref, out_ref, *, batch_size, tile_b, nclass):
    """Per-tile partial sum of cross-entropy losses.

    pred_ref:  (tb, C) logits block (native dtype)
    label_ref: (1, 1, tb) int32 labels (lane-dense, one label per lane)
    out_ref:   (1, 8, 128) f32 partial loss sum (broadcast, unmasked store)
    """
    i = pl.program_id(0)

    # (tb, C) -> f32 -> (C, tb): class on sublanes, batch on all 128 lanes.
    logits = pred_ref[...].astype(jnp.float32)
    xt = jnp.transpose(logits)                                    # (C, tb)

    # Numerically stable per-row logsumexp over the class (sublane) axis;
    # every elementwise op below runs lane-dense.
    m = jnp.max(xt, axis=0, keepdims=True)                        # (1, tb)
    e = jnp.exp(xt - m)                                           # (C, tb) EUP
    s = jnp.sum(e, axis=0, keepdims=True)                         # (1, tb)
    lse = m + jnp.log(s)                                          # (1, tb)

    # Pick the logit at the label: single compare+select pass over the tile.
    labels = label_ref[0]                                         # (1, tb) int32
    cls = jax.lax.broadcasted_iota(jnp.int32, (nclass, tile_b), 0)
    picked = jnp.sum(jnp.where(cls == labels, xt, 0.0), axis=0, keepdims=True)

    # Mask rows beyond the true batch size (last partial / oversized tile).
    # Fused into one cheap select on the (1, tb) per-row loss vector.
    row = jax.lax.broadcasted_iota(jnp.int32, (1, tile_b), 1) + i * tile_b
    loss = jnp.where(row < batch_size, lse - picked, 0.0)         # (1, tb)

    out_ref[...] = jnp.broadcast_to(jnp.sum(loss), out_ref.shape)


def _round_up(x, m):
    return (x + m - 1) // m * m


def _pick_tile_rows(batch, nclass, itemsize):
    """Pick batch-tile rows from the *padded* VMEM footprint."""
    pred_row = _round_up(nclass, _LANES) * itemsize    # lane-padded logits row
    label_row = _SUBLANES * 4                          # (1, tb) i32, 8-sublane pad
    c_pad = _round_up(nclass, _SUBLANES)
    temp_row = 5 * c_pad * 4                           # xt/exp/iota/select temps (f32)
    per_row = 2 * pred_row + 2 * label_row + temp_row  # 2x = double-buffered DMA

    tb = _VMEM_BUDGET // per_row
    tb = min(tb, _MAX_PRED_BUF // pred_row)            # cap per logits buffer
    # Keep >= ~4 tiles for large B so v7x's two TensorCores both get work.
    tb = min(tb, _round_up(pl.cdiv(batch, 4), _ROW_ALIGN))
    tb = max(_ROW_ALIGN, (tb // _ROW_ALIGN) * _ROW_ALIGN)
    return int(tb)


def _cls_loss_ref(pred, label):
    """Plain-jnp reference / tiny-input fast path."""
    logits = pred.astype(jnp.float32)
    lse = jax.nn.logsumexp(logits, axis=-1)
    picked = jnp.take_along_axis(
        logits, label.astype(jnp.int32)[:, None], axis=-1)[:, 0]
    return jnp.mean(lse - picked)


def _cls_loss_pallas(pred, label):
    B, C = pred.shape
    tb = _pick_tile_rows(B, C, jnp.dtype(pred.dtype).itemsize)
    grid = pl.cdiv(B, tb)

    # Lane-dense labels: (grid, 1, tb) int32, padded with a valid class id (0).
    labels = jnp.pad(label.astype(jnp.int32), (0, grid * tb - B))
    labels = labels.reshape(grid, 1, tb)

    kernel = functools.partial(
        _ce_partial_kernel, batch_size=B, tile_b=tb, nclass=C)

    partials = pl.pallas_call(
        kernel,
        grid=(grid,),
        out_shape=jax.ShapeDtypeStruct((grid, 8, 128), jnp.float32),
        in_specs=[
            pl.BlockSpec((tb, C), lambda i: (i, 0)),       # logits tile
            pl.BlockSpec((1, 1, tb), lambda i: (i, 0, 0)),  # lane-dense labels
        ],
        out_specs=pl.BlockSpec((1, 8, 128), lambda i: (i, 0, 0)),
        compiler_params=pltpu.CompilerParams(
            dimension_semantics=("parallel",),
            vmem_limit_bytes=_VMEM_LIMIT,
        ),
    )(pred, labels)

    # Finish the reduction in the wrapper: sum of per-tile partials / true B.
    return jnp.sum(partials[:, 0, 0]) / B


def cls_loss(pred, label, *, force_pallas=False):
    """Mean cross-entropy loss.

    pred:  (B, nclass) float logits (f32 or bf16)
    label: (B,) integer class indices in [0, nclass)
    """
    B, C = pred.shape
    if not force_pallas and B * C < _FAST_PATH_ELEMENTS:
        # Tiny inputs: pallas_call launch/pipeline overhead dominates.
        return _cls_loss_ref(pred, label)
    return _cls_loss_pallas(pred, label)


if __name__ == "__main__":
    key = jax.random.PRNGKey(0)
    k1, k2, k3, k4, k5, k6 = jax.random.split(key, 6)

    # 1) Module-sized input (B, nclass): hits the tiny-input fast path.
    B, nclass = 8, 16
    pred = jax.random.normal(k1, (B, nclass), dtype=jnp.float32)
    label = jax.random.randint(k2, (B,), 0, nclass, dtype=jnp.int32)
    loss = cls_loss(pred, label)
    jax.block_until_ready(loss)
    ref = _cls_loss_ref(pred, label)
    assert jnp.allclose(loss, ref, atol=1e-5, rtol=1e-5), (loss, ref)

    # 2) Exercise the Pallas kernel: several full batch tiles.
    B2 = 512
    pred2 = jax.random.normal(k3, (B2, nclass), dtype=jnp.float32)
    label2 = jax.random.randint(k4, (B2,), 0, nclass, dtype=jnp.int32)
    loss2 = cls_loss(pred2, label2, force_pallas=True)
    jax.block_until_ready(loss2)
    ref2 = _cls_loss_ref(pred2, label2)
    assert jnp.allclose(loss2, ref2, atol=1e-5, rtol=1e-5), (loss2, ref2)

    # 3) Ragged batch: partial last tile -> exercises the row-validity mask.
    B3 = 413
    pred3 = jax.random.normal(k5, (B3, nclass), dtype=jnp.float32)
    label3 = jax.random.randint(k6, (B3,), 0, nclass, dtype=jnp.int32)
    loss3 = cls_loss(pred3, label3, force_pallas=True)
    jax.block_until_ready(loss3)
    ref3 = _cls_loss_ref(pred3, label3)
    assert jnp.allclose(loss3, ref3, atol=1e-5, rtol=1e-5), (loss3, ref3)

    print("KERNEL_OK")
</pallas_src>

<mosaic_0001>
module attributes {stable_mosaic.version = 11 : i64} {
  func.func @_ce_partial_kernel(%arg0: i32, %arg1: memref<128x16xf32, #tpu.memory_space<vmem>>, %arg2: memref<1x1x128xi32, #tpu.memory_space<vmem>>, %arg3: memref<1x8x128xf32, #tpu.memory_space<vmem>>) attributes {dimension_semantics = [#tpu.dimension_semantics<parallel>], iteration_bounds = array<i64: 4>, scalar_prefetch = 0 : i64, scratch_operands = 0 : i64, tpu.core_type = #tpu.core_type<tc>, window_params = [{transform_indices = @transform_0, window_bounds = array<i64: 128, 16>}, {transform_indices = @transform_1, window_bounds = array<i64: 1, 1, 128>}, {transform_indices = @transform_2, window_bounds = array<i64: 1, 8, 128>}]} {
    %c0 = arith.constant 0 : index
    %c0_0 = arith.constant 0 : index
    %0 = vector.load %arg1[%c0, %c0_0] : memref<128x16xf32, #tpu.memory_space<vmem>>, vector<128x16xf32>
    %1 = tpu.transpose %0, [1, 0] : vector<128x16xf32> -> vector<16x128xf32>
    %cst = arith.constant dense<0xFF800000> : vector<128xf32>
    %2 = vector.multi_reduction <maximumf>, %1, %cst [0] : vector<16x128xf32> to vector<128xf32>
    %3 = vector.shape_cast %2 : vector<128xf32> to vector<1x128xf32>
    %4 = vector.broadcast %3 : vector<1x128xf32> to vector<16x128xf32>
    %5 = arith.subf %1, %4 : vector<16x128xf32>
    %6 = math.exp %5 : vector<16x128xf32>
    %cst_1 = arith.constant dense<0.000000e+00> : vector<128xf32>
    %7 = vector.multi_reduction <add>, %6, %cst_1 [0] : vector<16x128xf32> to vector<128xf32>
    %8 = vector.shape_cast %7 : vector<128xf32> to vector<1x128xf32>
    %9 = math.log %8 : vector<1x128xf32>
    %10 = arith.addf %3, %9 : vector<1x128xf32>
    %c0_2 = arith.constant 0 : index
    %c0_3 = arith.constant 0 : index
    %c0_4 = arith.constant 0 : index
    %11 = vector.load %arg2[%c0_2, %c0_3, %c0_4] : memref<1x1x128xi32, #tpu.memory_space<vmem>>, vector<1x1x128xi32>
    %12 = vector.shape_cast %11 : vector<1x1x128xi32> to vector<1x128xi32>
    %13 = tpu.iota {dimensions = array<i32: 0>} : vector<16x128xi32>
    %14 = vector.broadcast %12 : vector<1x128xi32> to vector<16x128xi32>
    %15 = arith.cmpi eq, %13, %14 : vector<16x128xi32>
    %cst_5 = arith.constant 0.000000e+00 : f32
    %16 = vector.broadcast %cst_5 : f32 to vector<16x128xf32>
    %17 = arith.select %15, %1, %16 : vector<16x128xi1>, vector<16x128xf32>
    %cst_6 = arith.constant dense<0.000000e+00> : vector<128xf32>
    %18 = vector.multi_reduction <add>, %17, %cst_6 [0] : vector<16x128xf32> to vector<128xf32>
    %19 = vector.shape_cast %18 : vector<128xf32> to vector<1x128xf32>
    %20 = tpu.iota {dimensions = array<i32: 1>} : vector<1x128xi32>
    %c128_i32 = arith.constant 128 : i32
    %21 = arith.muli %arg0, %c128_i32 : i32
    %22 = vector.broadcast %21 : i32 to vector<1x128xi32>
    %23 = arith.addi %20, %22 : vector<1x128xi32>
    %c512_i32 = arith.constant 512 : i32
    %24 = vector.broadcast %c512_i32 : i32 to vector<1x128xi32>
    %25 = arith.cmpi slt, %23, %24 : vector<1x128xi32>
    %26 = arith.subf %10, %19 : vector<1x128xf32>
    %cst_7 = arith.constant 0.000000e+00 : f32
    %27 = vector.broadcast %cst_7 : f32 to vector<1x128xf32>
    %28 = arith.select %25, %26, %27 : vector<1x128xi1>, vector<1x128xf32>
    %29 = vector.shape_cast %28 : vector<1x128xf32> to vector<1x1x128xf32>
    %cst_8 = arith.constant dense<0.000000e+00> : vector<1xf32>
    %30 = vector.multi_reduction <add>, %29, %cst_8 [1, 2] : vector<1x1x128xf32> to vector<1xf32>
    %31 = vector.shape_cast %30 : vector<1xf32> to vector<1x1x1xf32>
    %32 = vector.extract %31[0, 0, 0] : f32 from vector<1x1x1xf32>
    %33 = vector.broadcast %32 : f32 to vector<1x8x128xf32>
    %c0_9 = arith.constant 0 : index
    %c0_10 = arith.constant 0 : index
    %c0_11 = arith.constant 0 : index
    %34 = vector.load %arg3[%c0_9, %c0_10, %c0_11] : memref<1x8x128xf32, #tpu.memory_space<vmem>>, vector<1x8x128xf32>
    tpu.vector_store %arg3[%c0_9, %c0_10, %c0_11], %33 {strides = array<i32>} : memref<1x8x128xf32, #tpu.memory_space<vmem>>, vector<1x8x128xf32>,
    return
  }
  func.func @transform_0(%arg0: i32) -> (i32, i32) {
    %c0_i32 = arith.constant 0 : i32
    %c0_i32_0 = arith.constant 0 : i32
    return %arg0, %c0_i32 : i32, i32
  }
  func.func @transform_1(%arg0: i32) -> (i32, i32, i32) {
    %c0_i32 = arith.constant 0 : i32
    %c0_i32_0 = arith.constant 0 : i32
    %c0_i32_1 = arith.constant 0 : i32
    return %arg0, %c0_i32, %c0_i32_0 : i32, i32, i32
  }
  func.func @transform_2(%arg0: i32) -> (i32, i32, i32) {
    %c0_i32 = arith.constant 0 : i32
    %c0_i32_0 = arith.constant 0 : i32
    %c0_i32_1 = arith.constant 0 : i32
    return %arg0, %c0_i32, %c0_i32_0 : i32, i32, i32
  }
}

</mosaic_0001>

<llo_original>
// kernel: tpu_custom_call.1
$region0: #{tpu_custom_call.1}
  #allocation0 [shape = 'u32[]', space=smem, size = 0x4, offset = 0x4, fixed_abs, tag = 'smem constant byte address 0x4 - core index']
  #allocation1 [shape = 'u32[144,128]{1,0:T(1,128)}', space=vmem, size = 0x12000, scoped, tag = 'internal scratch']
  %s0 = inlined_call_operand.vmem [shape: f32[512,16], index: 0, kind: input, shape index: {}]
  %s1 = inlined_call_operand.vmem [shape: s32[4,1,128], index: 1, kind: input, shape index: {}]
  %s2 = inlined_call_operand.hbm [shape: f32[4,8,128], index: 2, kind: output, shape index: {}]
  %s3 = sld [smem:[#allocation0]]
  $region41: #{tpu_custom_call.1} parent=0
    _
  %s5 = ssub.s32 1, %s3
  %s6 = scalar_select 0, %s5, %s3
  $region1: #{tpu_custom_call.1} parent=0
    #allocation2 [shape = 'u8[8192]{0}', space=vmem, size = 0x2000, scoped, tag = 'output window, operand 0']
    #allocation3 [shape = 's32[2]{0}', space=sflag, size = 0x8, scoped, tag = 'scoped memory for tpu_custom_call.1']
    %7 = vsyncpa [#allocation3], 0
    %s8 = scalar_lea.sflag [#allocation3], 1
    %9 = vsyncpa %s8, 0
    loop: start=0, step=1, limit=6
    $region2: #{tpu_custom_call.1} parent=1 // loop_pre_header
      _
    $region3: #{tpu_custom_call.1} parent=1 // loop_header
      %s11 = sphi 0, %s15
      %p12 = scmp.ge.s32.totalorder %s11, 6
      %s21 = sphi 0, %s23
      %s24 = sphi 0, %s21
      %s25 = sphi 0, %s24
      %s41 = sphi 0, %s25
      %s47 = sphi 0, %s49
      %s50 = sphi 0, %s47
      %s51 = sphi 0, %s50
      %s67 = sphi 0, %s51
      %s73 = sphi 0, %s75
      %s76 = sphi 0, %s73
      %s77 = sphi 0, %s76
      %s93 = sphi 0, %s77
    $region4: #{tpu_custom_call.1} parent=1 // loop_header_branch
      %14 = sbr.rel (%p12) target = $region8
    $region5: #{tpu_custom_call.1} parent=1 // loop_body
      %s16 = ssub.s32 %s11, 1
      %s17 = ssub.s32 %s11, 2
      %s18 = sadd.s32 %s11, 1
      %s19 = ssub.s32 %s11, %s18
      %p20 = scmp.eq.s32.totalorder %s19, 0
      %s22 = sadd.s32 %s21, 1
      %s23 = scalar_select %p20, %s21, %s22
      %p26 = pneg %p20
      %p27 = scmp.eq.s32.totalorder %s11, 3
      %p28 = por %p26, %p27
      %p29 = scmp.ne.s32.totalorder %s21, %s24
      %p30 = scmp.eq.s32.totalorder %s11, 0
      %p31 = por %p29, %p30
      %p32 = scmp.ne.s32.totalorder %s21, %s24
      %p33 = scmp.eq.s32.totalorder %s16, 3
      %p34 = por %p32, %p33
      %p35 = scmp.ne.s32.totalorder %s24, %s25
      %p36 = scmp.eq.s32.totalorder %s16, 0
      %p37 = por %p35, %p36
      %p38 = scmp.ne.s32.totalorder %s24, %s25
      %p39 = scmp.eq.s32.totalorder %s17, 3
      %p40 = por %p38, %p39
      %p42 = scmp.ne.s32.totalorder %s25, %s41
      %p43 = scmp.eq.s32.totalorder %s17, 0
      %p44 = por %p42, %p43
      %s45 = ssub.s32 %s11, %s18
      %p46 = scmp.eq.s32.totalorder %s45, 0
      %s48 = sadd.s32 %s47, 1
      %s49 = scalar_select %p46, %s47, %s48
      %p52 = pneg %p46
      %p53 = scmp.eq.s32.totalorder %s11, 3
      %p54 = por %p52, %p53
      %p55 = scmp.ne.s32.totalorder %s47, %s50
      %p56 = scmp.eq.s32.totalorder %s11, 0
      %p57 = por %p55, %p56
      %p58 = scmp.ne.s32.totalorder %s47, %s50
      %p59 = scmp.eq.s32.totalorder %s16, 3
      %p60 = por %p58, %p59
      %p61 = scmp.ne.s32.totalorder %s50, %s51
      %p62 = scmp.eq.s32.totalorder %s16, 0
      %p63 = por %p61, %p62
      %p64 = scmp.ne.s32.totalorder %s50, %s51
      %p65 = scmp.eq.s32.totalorder %s17, 3
      %p66 = por %p64, %p65
      %p68 = scmp.ne.s32.totalorder %s51, %s67
      %p69 = scmp.eq.s32.totalorder %s17, 0
      %p70 = por %p68, %p69
      %s71 = ssub.s32 %s11, %s18
      %p72 = scmp.eq.s32.totalorder %s71, 0
      %s74 = sadd.s32 %s73, 1
      %s75 = scalar_select %p72, %s73, %s74
      %p78 = pneg %p72
      %p79 = scmp.eq.s32.totalorder %s11, 3
      %p80 = por %p78, %p79
      %p81 = scmp.ne.s32.totalorder %s73, %s76
      %p82 = scmp.eq.s32.totalorder %s11, 0
      %p83 = por %p81, %p82
      %p84 = scmp.ne.s32.totalorder %s73, %s76
      %p85 = scmp.eq.s32.totalorder %s16, 3
      %p86 = por %p84, %p85
      %p87 = scmp.ne.s32.totalorder %s76, %s77
      %p88 = scmp.eq.s32.totalorder %s16, 0
      %p89 = por %p87, %p88
      %p90 = scmp.ne.s32.totalorder %s76, %s77
      %p91 = scmp.eq.s32.totalorder %s17, 3
      %p92 = por %p90, %p91
      %p94 = scmp.ne.s32.totalorder %s77, %s93
      %p95 = scmp.eq.s32.totalorder %s17, 0
      %p96 = por %p94, %p95
      %p97 = scmp.le.s32.totalorder 1, %s11
      %p98 = scmp.lt.s32.totalorder %s11, 5
      %p99 = pnand %p97, %p98
      %p100 = pneg %p99
      // Predicated region
      $region9: #{tpu_custom_call.1} parent=5 // pred_check
        _
      $region10: #{tpu_custom_call.1} parent=5 // pred_check_branch
        %102 = sbr.rel (%p99) target = $region12
      $region11: #{tpu_custom_call.1} parent=5 // pred_region
        %s103 = ssub.s32 %s11, 1
      $region12: #{tpu_custom_call.1} parent=5 // pred_fallthru
        _
      %p104 = scmp.lt.s32.totalorder %s11, 4
      // Predicated region
      $region13: #{tpu_custom_call.1} parent=5 // pred_check
        %p105 = pneg %p104
      $region14: #{tpu_custom_call.1} parent=5 // pred_check_branch
        %107 = sbr.rel (%p105) target = $region16
      $region15: #{tpu_custom_call.1} parent=5 // pred_region
        // Predicated region
        $region17: #{tpu_custom_call.1} parent=15 // pred_check
          %p108 = pneg %p31
        $region18: #{tpu_custom_call.1} parent=15 // pred_check_branch
          %110 = sbr.rel (%p108) target = $region20
        $region19: #{tpu_custom_call.1} parent=15 // pred_region
          %s111 = smul.u32 16, %s11
          %p112 = scmp.lt.s32.totalorder %s111, 63
          %s113 = scalar_select %p112, %s111, 63
          %s114 = smul.addr %s113, 8
          %s115 = scalar_lea.vmem %s0, %s114
          %s116 = smul.u32 16, %s11
        $region20: #{tpu_custom_call.1} parent=15 // pred_fallthru
          _
        // Predicated region
        $region21: #{tpu_custom_call.1} parent=15 // pred_check
          %p117 = pneg %p57
        $region22: #{tpu_custom_call.1} parent=15 // pred_check_branch
          %119 = sbr.rel (%p117) target = $region24
        $region23: #{tpu_custom_call.1} parent=15 // pred_region
          %p120 = scmp.lt.s32.totalorder %s11, 3
          %s121 = scalar_select %p120, %s11, 3
          %s122 = scalar_lea.vmem %s1, %s121
        $region24: #{tpu_custom_call.1} parent=15 // pred_fallthru
          _
      $region16: #{tpu_custom_call.1} parent=5 // pred_fallthru
        _
      %p123 = scmp.le.s32.totalorder 1, %s11
      %p124 = scmp.lt.s32.totalorder %s11, 5
      %p125 = pnand %p123, %p124
      %p126 = pneg %p125
      // Predicated region
      $region25: #{tpu_custom_call.1} parent=5 // pred_check
        _
      $region26: #{tpu_custom_call.1} parent=5 // pred_check_branch
        %128 = sbr.rel (%p125) target = $region28
      $region27: #{tpu_custom_call.1} parent=5 // pred_region
        %s129 = ssub.s32 %s11, 1
        %s130 = smul.u32 16, %s16
        %p131 = scmp.lt.s32.totalorder %s130, 63
        %s132 = scalar_select %p131, %s130, 63
        %s133 = smul.addr %s132, 8
        %s134 = scalar_lea.vmem %s0, %s133
        %p135 = pneg %p37
        %p136 = pneg %p34
        %p137 = scmp.lt.s32.totalorder %s16, 3
        %s138 = scalar_select %p137, %s16, 3
        %s139 = scalar_lea.vmem %s1, %s138
        %p140 = pneg %p63
        %p141 = pneg %p60
        %p142 = pneg %p89
        %p143 = pneg %p86
        %s144 = sand.u32 %s76, 1
        %s145 = scalar_lea.sflag [#allocation3], %s144
        %s146 = sand.u32 %s76, 1
        %s147 = smul.addr %s146, 8
        %s148 = scalar_lea.vmem [#allocation2], %s147
        %s149 = smul.u32 16, %s16
        %p150 = scmp.lt.s32.totalorder %s149, 63
        %s151 = scalar_select %p150, %s149, 63
        %s152 = smul.addr %s151, 8
        %s153 = scalar_lea.vmem %s0, %s152
        %s154 = smul.u32 16, %s16
        %p155 = scmp.lt.s32.totalorder %s16, 3
        %s156 = scalar_select %p155, %s16, 3
        %s157 = scalar_lea.vmem %s1, %s156
        %v158 = vld [vmem:[%s153] sm:$0xff]
        %v159 = vld [vmem:[%s153 + $0x8] sm:$0xff]
        %v160 = vld [vmem:[%s153 + $0x10] sm:$0xff]
        %v161 = vld [vmem:[%s153 + $0x18] sm:$0xff]
        %v162 = vld [vmem:[%s153 + $0x20] sm:$0xff]
        %v163 = vld [vmem:[%s153 + $0x28] sm:$0xff]
        %v164 = vld [vmem:[%s153 + $0x30] sm:$0xff]
        %v165 = vld [vmem:[%s153 + $0x38] sm:$0xff]
        %v166 = vld [vmem:[%s153 + $0x40] sm:$0xff]
        %v167 = vld [vmem:[%s153 + $0x48] sm:$0xff]
        %v168 = vld [vmem:[%s153 + $0x50] sm:$0xff]
        %v169 = vld [vmem:[%s153 + $0x58] sm:$0xff]
        %v170 = vld [vmem:[%s153 + $0x60] sm:$0xff]
        %v171 = vld [vmem:[%s153 + $0x68] sm:$0xff]
        %v172 = vld [vmem:[%s153 + $0x70] sm:$0xff]
        %v173 = vld [vmem:[%s153 + $0x78] sm:$0xff]
        %174 = vxpose.xlu0.b32.start [1/16] %v158, 128
        %175 = vxpose.xlu0.b32.cont [2/16] %v159, 128
        %176 = vxpose.xlu0.b32.cont [3/16] %v160, 128
        %177 = vxpose.xlu0.b32.cont [4/16] %v161, 128
        %178 = vxpose.xlu0.b32.cont [5/16] %v162, 128
        %179 = vxpose.xlu0.b32.cont [6/16] %v163, 128
        %180 = vxpose.xlu0.b32.cont [7/16] %v164, 128
        %181 = vxpose.xlu0.b32.cont [8/16] %v165, 128
        %182 = vxpose.xlu0.b32.cont [9/16] %v166, 128
        %183 = vxpose.xlu0.b32.cont [10/16] %v167, 128
        %184 = vxpose.xlu0.b32.cont [11/16] %v168, 128
        %185 = vxpose.xlu0.b32.cont [12/16] %v169, 128
        %186 = vxpose.xlu0.b32.cont [13/16] %v170, 128
        %187 = vxpose.xlu0.b32.cont [14/16] %v171, 128
        %188 = vxpose.xlu0.b32.cont [15/16] %v172, 128
        %189 = vxpose.xlu0.b32.end [16/16] %v173, 128
        %v190 = vpop.trf.xlu0
        %v191 = vpop.trf.xlu0
        %v192 = vpop.trf.xlu0
        %v193 = vpop.trf.xlu0
        %v194 = vpop.trf.xlu0
        %v195 = vpop.trf.xlu0
        %v196 = vpop.trf.xlu0
        %v197 = vpop.trf.xlu0
        %v198 = vpop.trf.xlu0
        %v199 = vpop.trf.xlu0
        %v200 = vpop.trf.xlu0
        %v201 = vpop.trf.xlu0
        %v202 = vpop.trf.xlu0
        %v203 = vpop.trf.xlu0
        %v204 = vpop.trf.xlu0
        %v205 = vpop.trf.xlu0
        %v206 = vmax.f32 %v190, %v191
        %v207 = vrot.slane %v206, 4
        %v208 = vmax.f32 %v206, %v207
        %v209 = vrot.slane %v208, 2
        %v210 = vmax.f32 %v208, %v209
        %v211 = vrot.slane %v210, 1
        %v212 = vmax.f32 %v210, %v211
        %v213 = vsub.f32 %v190, %v212
        %v214 = vsub.f32 %v191, %v212
        %v215 = vmul.f32 %v213, 1.442695
        %v216 = vpow.pop %v215
        %v217 = vmul.f32 %v214, 1.442695
        %v218 = vpow.pop %v217
        %v219 = vadd.f32 %v216, %v218
        %v220 = vrot.slane %v219, 4
        %v221 = vadd.f32 %v219, %v220
        %v222 = vrot.slane %v221, 2
        %v223 = vadd.f32 %v221, %v222
        %v224 = vrot.slane %v223, 1
        %v225 = vadd.f32 %v223, %v224
        %v226 = vlog2.pop %v225
        %v227 = vmul.f32 %v226, 0.6931472
        %v228 = vadd.f32 %v212, %v227
        %v229 = vld [vmem:[%s157] sm:$0x1]
        %v230 = vlaneseq
        %v231 = vshrl.u32 %v230, 7
        %v232 = vadd.s32 %v231, 8
        %v233 = vlaneseq
        %v234 = vshrl.u32 %v233, 7
        %v235 = vsub.s32 0, %v234
        %v236 = vrot.slane %v229, %v235
        %vm237 = vcmp.eq.s32.totalorder %v231, %v236
        %vm238 = vcmp.eq.s32.totalorder %v232, %v236
        %v239 = vsel %vm237, %v190, 0.0
        %v240 = vsel %vm238, %v191, 0.0
        %v241 = vadd.f32 %v239, %v240
        %v242 = vrot.slane %v241, 4
        %v243 = vadd.f32 %v241, %v242
        %v244 = vrot.slane %v243, 2
        %v245 = vadd.f32 %v243, %v244
        %v246 = vrot.slane %v245, 1
        %v247 = vadd.f32 %v245, %v246
        %v248 = vlaneseq
        %v249 = vand.u32 %v248, 127
        %s250 = smul.u32 %s16, 128
        %v251 = vstv %s250
        %v252 = vadd.s32 %v249, %v251
        %vm253 = vcmp.lt.s32.totalorder %v252, 512
        %v254 = vsub.f32 %v228, %v247
        %v255 = vsel %vm253, %v254, 0.0
        %vm256 = vcmask 1040384
        %v257 = vsel %vm256, %v255, 0.0
        %258 = vadd.xlane.f32.xlu0 %v257
        %v259 = vpop.xlane.xlu0 %258
        %v260 = vrot.slane %v259, 4
        %v261 = vadd.f32 %v259, %v260
        %v262 = vrot.slane %v261, 2
        %v263 = vadd.f32 %v261, %v262
        %v264 = vrot.slane %v263, 1
        %v265 = vadd.f32 %v263, %v264
        %s266 = vtos %v265
        %v267 = vstv %s266
        %268 = vst [vmem:[%s148] sm:$0xff] %v267
        %s269 = sand.u32 %s76, 1
        %s270 = scalar_lea.sflag [#allocation3], %s269
        %s271 = sand.u32 %s76, 1
        %s272 = smul.addr %s271, 8
        %s273 = scalar_lea.vmem [#allocation2], %s272
        // Predicated region
        $region29: #{tpu_custom_call.1} parent=27 // pred_check
          %p274 = pneg %p86
        $region30: #{tpu_custom_call.1} parent=27 // pred_check_branch
          %276 = sbr.rel (%p274) target = $region32
        $region31: #{tpu_custom_call.1} parent=27 // pred_region
          %s278 = ssub.s32 128, 128
          %279 = vsyncadd %s270, %s278
          %s280 = smul.addr %s16, 128
          %s281 = scalar_lea.hbm %s2, %s280
          %s283 = sshll.u32 %s273, 4
          %s284 = int_to_ptr.vmem [resolvable:$true] %s283
          %286 = dma.vmem_to_hbm [thread:$0]  %s284, 128, %s281, %s270
        $region32: #{tpu_custom_call.1} parent=27 // pred_fallthru
          _
      $region28: #{tpu_custom_call.1} parent=5 // pred_fallthru
        _
      %p287 = scmp.le.s32.totalorder 2, %s11
      // Predicated region
      $region33: #{tpu_custom_call.1} parent=5 // pred_check
        %p288 = pneg %p287
      $region34: #{tpu_custom_call.1} parent=5 // pred_check_branch
        %290 = sbr.rel (%p288) target = $region36
      $region35: #{tpu_custom_call.1} parent=5 // pred_region
        %s291 = ssub.s32 %s11, 2
        // Predicated region
        $region37: #{tpu_custom_call.1} parent=35 // pred_check
          %p292 = pneg %p92
        $region38: #{tpu_custom_call.1} parent=35 // pred_check_branch
          %294 = sbr.rel (%p292) target = $region40
        $region39: #{tpu_custom_call.1} parent=35 // pred_region
          %s295 = sand.u32 %s77, 1
          %s296 = scalar_lea.sflag [#allocation3], %s295
          %s297 = sand.u32 %s77, 1
          %s298 = smul.addr %s297, 8
          %s299 = scalar_lea.vmem [#allocation2], %s298
          %300 = dma.done %s296, 128
        $region40: #{tpu_custom_call.1} parent=35 // pred_fallthru
          _
      $region36: #{tpu_custom_call.1} parent=5 // pred_fallthru
        _
    $region6: #{tpu_custom_call.1} parent=1 // loop_footer
      %s15 = sadd.s32 1, %s11
    $region7: #{tpu_custom_call.1} parent=1 // loop_footer_branch
      %10 = sbr.rel target = $region3
    $region8: #{tpu_custom_call.1} parent=1 // loop_exit
      _
    %301 = vsyncpa [#allocation3], 1
    %s302 = scalar_lea.sflag [#allocation3], 1
    %303 = vsyncpa %s302, 1

</llo_original>
